<compile_context>
chip_gen: v5e
topology: v5e:2x2
jax: 0.10.0
libtpu: 0.0.40
codegen_flags: <defaults>
</compile_context>

<pallas_src>
import functools

import jax
import jax.numpy as jnp
from jax.experimental import pallas as pl
from jax.experimental.pallas import tpu as pltpu

NUM_CLASSES = 8
LAMBDA_COORD = 1.5
LAMBDA_SIZE = 1.0
LAMBDA_CLASS = 1.0
BG_WEIGHT = 0.1

_LANES = 128
_SUBLANES = 8


def _yolso_loss_kernel(pred_ref, tgt_ref, out_ref, *, num_classes, s_tile,
                       coord_scale, size_scale, class_scale, bg_weight):
    """One (S_TILE, 128) spatial tile of one batch element -> (8,128) partial."""
    C = num_classes

    # Object mask (1 at object cells, 0 at background cells).  Zero-padded
    # spatial columns have pred == tgt == 0, so every term below is exactly 0
    # there even though obj evaluates to 1.
    obj = 1.0 - tgt_ref[0, C]                                    # (S, 128)

    # --- coord / size L1 terms: |obj*pred - obj*tgt| = |obj * (pred - tgt)| --
    coord = (jnp.abs(obj * (pred_ref[0, C + 1] - tgt_ref[0, C + 1]))
             + jnp.abs(obj * (pred_ref[0, C + 2] - tgt_ref[0, C + 2])))
    size = jnp.abs(obj * (pred_ref[0, C + 3] - tgt_ref[0, C + 3]))

    # --- weighted soft-label cross entropy over channels 0 .. C --------------
    # Masked logits / targets: one dense (S,128) plane per class channel.
    zs = [obj * pred_ref[0, c] for c in range(C + 1)]
    ts = [obj * tgt_ref[0, c] for c in range(C + 1)]

    # max over class channels (VPU maximum chain)
    m = zs[0]
    for c in range(1, C + 1):
        m = jnp.maximum(m, zs[c])
    # log-sum-exp over class channels (EUP exp + VPU adds)
    se = jnp.exp(zs[0] - m)
    for c in range(1, C + 1):
        se = se + jnp.exp(zs[c] - m)
    lse = jnp.log(se)
    # ce = -sum_c t_c*(z_c - m - lse) = (m + lse)*sum_c t_c - sum_c t_c*z_c
    tsum = ts[0]
    tz = ts[0] * zs[0]
    for c in range(1, C + 1):
        tsum = tsum + ts[c]
        tz = tz + ts[c] * zs[c]
    ce = (m + lse) * tsum - tz                                   # (S, 128)

    # torch.argmax(masked pred, dim=channel) == C (first-occurrence tie-break)
    #   <=> masked pred[C] strictly greater than every earlier class logit.
    mx_fg = zs[0]
    for c in range(1, C):
        mx_fg = jnp.maximum(mx_fg, zs[c])
    wmask = (ts[C] == 0.0) & (zs[C] > mx_fg)
    w = jnp.where(wmask, jnp.float32(bg_weight), jnp.float32(1.0))

    # --- pre-scaled per-location partial loss ---------------------------------
    partial = (coord_scale * coord + size_scale * size
               + class_scale * (ce * w))                         # (S, 128)

    # Fold the S_TILE rows into one (8, 128) plane with pure VPU adds
    # (slices are 8-row aligned -> vreg picks, no layout copies) and write a
    # lane-dense partial output (collapsed to a scalar in the wrapper).
    acc = partial[0:_SUBLANES, :]
    for r in range(_SUBLANES, s_tile, _SUBLANES):
        acc = acc + partial[r:r + _SUBLANES, :]
    out_ref[0, 0] = acc


def yolso_v1_loss(pred, target, num_classes=NUM_CLASSES,
                  lambda_coord=LAMBDA_COORD, lambda_size=LAMBDA_SIZE,
                  lambda_class=LAMBDA_CLASS, bg_weight=BG_WEIGHT,
                  max_rows_per_tile=256):
    """pred, target: NCHW float arrays of shape (B, num_classes+4, H, W)."""
    B, Cch, H, W = pred.shape
    assert Cch == num_classes + 4
    hw = H * W

    # Spatial tiling: dense (rows, 128) planes per channel; the grid walks
    # S_TILE-row tiles (S_TILE multiple of 8, capped so double-buffered VMEM
    # stays ~6 MiB on every TPU generation).
    rows_needed = pl.cdiv(hw, _LANES)
    s_tile = min(max_rows_per_tile, _SUBLANES * pl.cdiv(rows_needed, _SUBLANES))
    rows = s_tile * pl.cdiv(rows_needed, s_tile)
    hw_pad = rows * _LANES
    num_tiles = rows // s_tile

    pred2 = pred.reshape(B, Cch, hw).astype(jnp.float32)
    tgt2 = target.reshape(B, Cch, hw).astype(jnp.float32)
    if hw_pad != hw:
        pad = ((0, 0), (0, 0), (0, hw_pad - hw))
        pred2 = jnp.pad(pred2, pad)
        tgt2 = jnp.pad(tgt2, pad)
    pred2 = pred2.reshape(B, Cch, rows, _LANES)
    tgt2 = tgt2.reshape(B, Cch, rows, _LANES)

    n = float(B * hw)  # un-padded normalizer
    kernel = functools.partial(
        _yolso_loss_kernel, num_classes=num_classes, s_tile=s_tile,
        coord_scale=lambda_coord / (2.0 * n),
        size_scale=lambda_size / n,
        class_scale=lambda_class / n,
        bg_weight=bg_weight)

    partials = pl.pallas_call(
        kernel,
        out_shape=jax.ShapeDtypeStruct((B, num_tiles, _SUBLANES, _LANES),
                                       jnp.float32),
        grid_spec=pltpu.PrefetchScalarGridSpec(
            num_scalar_prefetch=0,
            grid=(B, num_tiles),
            in_specs=[
                pl.BlockSpec((1, Cch, s_tile, _LANES),
                             lambda b, t: (b, 0, t, 0)),
                pl.BlockSpec((1, Cch, s_tile, _LANES),
                             lambda b, t: (b, 0, t, 0)),
            ],
            out_specs=pl.BlockSpec((1, 1, _SUBLANES, _LANES),
                                   lambda b, t: (b, t, 0, 0))),
        compiler_params=pltpu.CompilerParams(
            dimension_semantics=("parallel", "parallel"),
            vmem_limit_bytes=32 * 1024 * 1024),
    )(pred2, tgt2)
    # Tiny (B, num_tiles, 8, 128) partial array -> scalar total loss.
    return jnp.sum(partials)


def _ref_loss(pred, target, C):
    """Pure-JAX reference mirroring the PyTorch module."""
    obj_mask = 1.0 - target[:, C, :, :]
    m = obj_mask[:, None, :, :]
    opred = m * pred
    otgt = m * target
    coord_loss = jnp.mean(jnp.abs(opred[:, C + 1:C + 3] - otgt[:, C + 1:C + 3]))
    size_loss = jnp.mean(jnp.abs(opred[:, C + 3] - otgt[:, C + 3]))
    cp = opred[:, :C + 1]
    ct = otgt[:, :C + 1]
    log_sm = jax.nn.log_softmax(cp, axis=1)
    ce = -jnp.sum(ct * log_sm, axis=1)
    am = jnp.argmax(cp, axis=1)
    wmask = (ct[:, C] == 0.0) & (am == C)
    w = jnp.where(wmask, BG_WEIGHT, 1.0)
    class_loss = jnp.mean(ce * w)
    return (LAMBDA_COORD * coord_loss + LAMBDA_SIZE * size_loss
            + LAMBDA_CLASS * class_loss)


if __name__ == "__main__":
    key = jax.random.PRNGKey(0)
    B, C, G = 2, NUM_CLASSES, 16          # grid_num = 16, num_classes = 8
    kp, kb, kc, kxy, ks = jax.random.split(key, 5)

    pred = jax.random.normal(kp, (B, C + 4, G, G), dtype=jnp.float32)

    bg = jax.random.bernoulli(kb, 0.5, (B, G, G)).astype(jnp.float32)
    cls_idx = jax.random.randint(kc, (B, G, G), 0, C)
    one_hot = jnp.moveaxis(jax.nn.one_hot(cls_idx, C, dtype=jnp.float32), -1, 1)
    one_hot = one_hot * (1.0 - bg)[:, None]
    coords = jax.random.uniform(kxy, (B, 2, G, G), dtype=jnp.float32) * (1.0 - bg)[:, None]
    size = jax.random.uniform(ks, (B, 1, G, G), dtype=jnp.float32) * (1.0 - bg)[:, None]
    target = jnp.concatenate([one_hot, bg[:, None], coords, size], axis=1)

    loss_fn = jax.jit(lambda p, t: yolso_v1_loss(p, t))
    total = jax.block_until_ready(loss_fn(pred, target))

    ref = _ref_loss(pred, target, C)
    assert jnp.allclose(total, ref, rtol=1e-4, atol=1e-5), (total, ref)
    print("KERNEL_OK")
</pallas_src>

<mosaic_0001>
module attributes {stable_mosaic.version = 11 : i64} {
  func.func @_yolso_loss_kernel(%arg0: i32, %arg1: i32, %arg2: memref<1x12x8x128xf32, #tpu.memory_space<vmem>>, %arg3: memref<1x12x8x128xf32, #tpu.memory_space<vmem>>, %arg4: memref<1x1x8x128xf32, #tpu.memory_space<vmem>>) attributes {dimension_semantics = [#tpu.dimension_semantics<parallel>, #tpu.dimension_semantics<parallel>], iteration_bounds = array<i64: 2, 1>, scalar_prefetch = 0 : i64, scratch_operands = 0 : i64, tpu.core_type = #tpu.core_type<tc>, window_params = [{transform_indices = @transform_0, window_bounds = array<i64: 1, 12, 8, 128>}, {transform_indices = @transform_1, window_bounds = array<i64: 1, 12, 8, 128>}, {transform_indices = @transform_2, window_bounds = array<i64: 1, 1, 8, 128>}]} {
    %c0 = arith.constant 0 : index
    %c8 = arith.constant 8 : index
    %c0_0 = arith.constant 0 : index
    %c0_1 = arith.constant 0 : index
    %0 = vector.load %arg3[%c0, %c8, %c0_0, %c0_1] : memref<1x12x8x128xf32, #tpu.memory_space<vmem>>, vector<1x1x8x128xf32>
    %1 = vector.shape_cast %0 : vector<1x1x8x128xf32> to vector<8x128xf32>
    %cst = arith.constant 1.000000e+00 : f32
    %2 = vector.broadcast %cst : f32 to vector<8x128xf32>
    %3 = arith.subf %2, %1 : vector<8x128xf32>
    %c0_2 = arith.constant 0 : index
    %c9 = arith.constant 9 : index
    %c0_3 = arith.constant 0 : index
    %c0_4 = arith.constant 0 : index
    %4 = vector.load %arg2[%c0_2, %c9, %c0_3, %c0_4] : memref<1x12x8x128xf32, #tpu.memory_space<vmem>>, vector<1x1x8x128xf32>
    %5 = vector.shape_cast %4 : vector<1x1x8x128xf32> to vector<8x128xf32>
    %c0_5 = arith.constant 0 : index
    %c9_6 = arith.constant 9 : index
    %c0_7 = arith.constant 0 : index
    %c0_8 = arith.constant 0 : index
    %6 = vector.load %arg3[%c0_5, %c9_6, %c0_7, %c0_8] : memref<1x12x8x128xf32, #tpu.memory_space<vmem>>, vector<1x1x8x128xf32>
    %7 = vector.shape_cast %6 : vector<1x1x8x128xf32> to vector<8x128xf32>
    %8 = arith.subf %5, %7 : vector<8x128xf32>
    %9 = arith.mulf %3, %8 : vector<8x128xf32>
    %10 = math.absf %9 : vector<8x128xf32>
    %c0_9 = arith.constant 0 : index
    %c10 = arith.constant 10 : index
    %c0_10 = arith.constant 0 : index
    %c0_11 = arith.constant 0 : index
    %11 = vector.load %arg2[%c0_9, %c10, %c0_10, %c0_11] : memref<1x12x8x128xf32, #tpu.memory_space<vmem>>, vector<1x1x8x128xf32>
    %12 = vector.shape_cast %11 : vector<1x1x8x128xf32> to vector<8x128xf32>
    %c0_12 = arith.constant 0 : index
    %c10_13 = arith.constant 10 : index
    %c0_14 = arith.constant 0 : index
    %c0_15 = arith.constant 0 : index
    %13 = vector.load %arg3[%c0_12, %c10_13, %c0_14, %c0_15] : memref<1x12x8x128xf32, #tpu.memory_space<vmem>>, vector<1x1x8x128xf32>
    %14 = vector.shape_cast %13 : vector<1x1x8x128xf32> to vector<8x128xf32>
    %15 = arith.subf %12, %14 : vector<8x128xf32>
    %16 = arith.mulf %3, %15 : vector<8x128xf32>
    %17 = math.absf %16 : vector<8x128xf32>
    %18 = arith.addf %10, %17 : vector<8x128xf32>
    %c0_16 = arith.constant 0 : index
    %c11 = arith.constant 11 : index
    %c0_17 = arith.constant 0 : index
    %c0_18 = arith.constant 0 : index
    %19 = vector.load %arg2[%c0_16, %c11, %c0_17, %c0_18] : memref<1x12x8x128xf32, #tpu.memory_space<vmem>>, vector<1x1x8x128xf32>
    %20 = vector.shape_cast %19 : vector<1x1x8x128xf32> to vector<8x128xf32>
    %c0_19 = arith.constant 0 : index
    %c11_20 = arith.constant 11 : index
    %c0_21 = arith.constant 0 : index
    %c0_22 = arith.constant 0 : index
    %21 = vector.load %arg3[%c0_19, %c11_20, %c0_21, %c0_22] : memref<1x12x8x128xf32, #tpu.memory_space<vmem>>, vector<1x1x8x128xf32>
    %22 = vector.shape_cast %21 : vector<1x1x8x128xf32> to vector<8x128xf32>
    %23 = arith.subf %20, %22 : vector<8x128xf32>
    %24 = arith.mulf %3, %23 : vector<8x128xf32>
    %25 = math.absf %24 : vector<8x128xf32>
    %c0_23 = arith.constant 0 : index
    %c0_24 = arith.constant 0 : index
    %c0_25 = arith.constant 0 : index
    %c0_26 = arith.constant 0 : index
    %26 = vector.load %arg2[%c0_23, %c0_24, %c0_25, %c0_26] : memref<1x12x8x128xf32, #tpu.memory_space<vmem>>, vector<1x1x8x128xf32>
    %27 = vector.shape_cast %26 : vector<1x1x8x128xf32> to vector<8x128xf32>
    %28 = arith.mulf %3, %27 : vector<8x128xf32>
    %c0_27 = arith.constant 0 : index
    %c1 = arith.constant 1 : index
    %c0_28 = arith.constant 0 : index
    %c0_29 = arith.constant 0 : index
    %29 = vector.load %arg2[%c0_27, %c1, %c0_28, %c0_29] : memref<1x12x8x128xf32, #tpu.memory_space<vmem>>, vector<1x1x8x128xf32>
    %30 = vector.shape_cast %29 : vector<1x1x8x128xf32> to vector<8x128xf32>
    %31 = arith.mulf %3, %30 : vector<8x128xf32>
    %c0_30 = arith.constant 0 : index
    %c2 = arith.constant 2 : index
    %c0_31 = arith.constant 0 : index
    %c0_32 = arith.constant 0 : index
    %32 = vector.load %arg2[%c0_30, %c2, %c0_31, %c0_32] : memref<1x12x8x128xf32, #tpu.memory_space<vmem>>, vector<1x1x8x128xf32>
    %33 = vector.shape_cast %32 : vector<1x1x8x128xf32> to vector<8x128xf32>
    %34 = arith.mulf %3, %33 : vector<8x128xf32>
    %c0_33 = arith.constant 0 : index
    %c3 = arith.constant 3 : index
    %c0_34 = arith.constant 0 : index
    %c0_35 = arith.constant 0 : index
    %35 = vector.load %arg2[%c0_33, %c3, %c0_34, %c0_35] : memref<1x12x8x128xf32, #tpu.memory_space<vmem>>, vector<1x1x8x128xf32>
    %36 = vector.shape_cast %35 : vector<1x1x8x128xf32> to vector<8x128xf32>
    %37 = arith.mulf %3, %36 : vector<8x128xf32>
    %c0_36 = arith.constant 0 : index
    %c4 = arith.constant 4 : index
    %c0_37 = arith.constant 0 : index
    %c0_38 = arith.constant 0 : index
    %38 = vector.load %arg2[%c0_36, %c4, %c0_37, %c0_38] : memref<1x12x8x128xf32, #tpu.memory_space<vmem>>, vector<1x1x8x128xf32>
    %39 = vector.shape_cast %38 : vector<1x1x8x128xf32> to vector<8x128xf32>
    %40 = arith.mulf %3, %39 : vector<8x128xf32>
    %c0_39 = arith.constant 0 : index
    %c5 = arith.constant 5 : index
    %c0_40 = arith.constant 0 : index
    %c0_41 = arith.constant 0 : index
    %41 = vector.load %arg2[%c0_39, %c5, %c0_40, %c0_41] : memref<1x12x8x128xf32, #tpu.memory_space<vmem>>, vector<1x1x8x128xf32>
    %42 = vector.shape_cast %41 : vector<1x1x8x128xf32> to vector<8x128xf32>
    %43 = arith.mulf %3, %42 : vector<8x128xf32>
    %c0_42 = arith.constant 0 : index
    %c6 = arith.constant 6 : index
    %c0_43 = arith.constant 0 : index
    %c0_44 = arith.constant 0 : index
    %44 = vector.load %arg2[%c0_42, %c6, %c0_43, %c0_44] : memref<1x12x8x128xf32, #tpu.memory_space<vmem>>, vector<1x1x8x128xf32>
    %45 = vector.shape_cast %44 : vector<1x1x8x128xf32> to vector<8x128xf32>
    %46 = arith.mulf %3, %45 : vector<8x128xf32>
    %c0_45 = arith.constant 0 : index
    %c7 = arith.constant 7 : index
    %c0_46 = arith.constant 0 : index
    %c0_47 = arith.constant 0 : index
    %47 = vector.load %arg2[%c0_45, %c7, %c0_46, %c0_47] : memref<1x12x8x128xf32, #tpu.memory_space<vmem>>, vector<1x1x8x128xf32>
    %48 = vector.shape_cast %47 : vector<1x1x8x128xf32> to vector<8x128xf32>
    %49 = arith.mulf %3, %48 : vector<8x128xf32>
    %c0_48 = arith.constant 0 : index
    %c8_49 = arith.constant 8 : index
    %c0_50 = arith.constant 0 : index
    %c0_51 = arith.constant 0 : index
    %50 = vector.load %arg2[%c0_48, %c8_49, %c0_50, %c0_51] : memref<1x12x8x128xf32, #tpu.memory_space<vmem>>, vector<1x1x8x128xf32>
    %51 = vector.shape_cast %50 : vector<1x1x8x128xf32> to vector<8x128xf32>
    %52 = arith.mulf %3, %51 : vector<8x128xf32>
    %c0_52 = arith.constant 0 : index
    %c0_53 = arith.constant 0 : index
    %c0_54 = arith.constant 0 : index
    %c0_55 = arith.constant 0 : index
    %53 = vector.load %arg3[%c0_52, %c0_53, %c0_54, %c0_55] : memref<1x12x8x128xf32, #tpu.memory_space<vmem>>, vector<1x1x8x128xf32>
    %54 = vector.shape_cast %53 : vector<1x1x8x128xf32> to vector<8x128xf32>
    %55 = arith.mulf %3, %54 : vector<8x128xf32>
    %c0_56 = arith.constant 0 : index
    %c1_57 = arith.constant 1 : index
    %c0_58 = arith.constant 0 : index
    %c0_59 = arith.constant 0 : index
    %56 = vector.load %arg3[%c0_56, %c1_57, %c0_58, %c0_59] : memref<1x12x8x128xf32, #tpu.memory_space<vmem>>, vector<1x1x8x128xf32>
    %57 = vector.shape_cast %56 : vector<1x1x8x128xf32> to vector<8x128xf32>
    %58 = arith.mulf %3, %57 : vector<8x128xf32>
    %c0_60 = arith.constant 0 : index
    %c2_61 = arith.constant 2 : index
    %c0_62 = arith.constant 0 : index
    %c0_63 = arith.constant 0 : index
    %59 = vector.load %arg3[%c0_60, %c2_61, %c0_62, %c0_63] : memref<1x12x8x128xf32, #tpu.memory_space<vmem>>, vector<1x1x8x128xf32>
    %60 = vector.shape_cast %59 : vector<1x1x8x128xf32> to vector<8x128xf32>
    %61 = arith.mulf %3, %60 : vector<8x128xf32>
    %c0_64 = arith.constant 0 : index
    %c3_65 = arith.constant 3 : index
    %c0_66 = arith.constant 0 : index
    %c0_67 = arith.constant 0 : index
    %62 = vector.load %arg3[%c0_64, %c3_65, %c0_66, %c0_67] : memref<1x12x8x128xf32, #tpu.memory_space<vmem>>, vector<1x1x8x128xf32>
    %63 = vector.shape_cast %62 : vector<1x1x8x128xf32> to vector<8x128xf32>
    %64 = arith.mulf %3, %63 : vector<8x128xf32>
    %c0_68 = arith.constant 0 : index
    %c4_69 = arith.constant 4 : index
    %c0_70 = arith.constant 0 : index
    %c0_71 = arith.constant 0 : index
    %65 = vector.load %arg3[%c0_68, %c4_69, %c0_70, %c0_71] : memref<1x12x8x128xf32, #tpu.memory_space<vmem>>, vector<1x1x8x128xf32>
    %66 = vector.shape_cast %65 : vector<1x1x8x128xf32> to vector<8x128xf32>
    %67 = arith.mulf %3, %66 : vector<8x128xf32>
    %c0_72 = arith.constant 0 : index
    %c5_73 = arith.constant 5 : index
    %c0_74 = arith.constant 0 : index
    %c0_75 = arith.constant 0 : index
    %68 = vector.load %arg3[%c0_72, %c5_73, %c0_74, %c0_75] : memref<1x12x8x128xf32, #tpu.memory_space<vmem>>, vector<1x1x8x128xf32>
    %69 = vector.shape_cast %68 : vector<1x1x8x128xf32> to vector<8x128xf32>
    %70 = arith.mulf %3, %69 : vector<8x128xf32>
    %c0_76 = arith.constant 0 : index
    %c6_77 = arith.constant 6 : index
    %c0_78 = arith.constant 0 : index
    %c0_79 = arith.constant 0 : index
    %71 = vector.load %arg3[%c0_76, %c6_77, %c0_78, %c0_79] : memref<1x12x8x128xf32, #tpu.memory_space<vmem>>, vector<1x1x8x128xf32>
    %72 = vector.shape_cast %71 : vector<1x1x8x128xf32> to vector<8x128xf32>
    %73 = arith.mulf %3, %72 : vector<8x128xf32>
    %c0_80 = arith.constant 0 : index
    %c7_81 = arith.constant 7 : index
    %c0_82 = arith.constant 0 : index
    %c0_83 = arith.constant 0 : index
    %74 = vector.load %arg3[%c0_80, %c7_81, %c0_82, %c0_83] : memref<1x12x8x128xf32, #tpu.memory_space<vmem>>, vector<1x1x8x128xf32>
    %75 = vector.shape_cast %74 : vector<1x1x8x128xf32> to vector<8x128xf32>
    %76 = arith.mulf %3, %75 : vector<8x128xf32>
    %c0_84 = arith.constant 0 : index
    %c8_85 = arith.constant 8 : index
    %c0_86 = arith.constant 0 : index
    %c0_87 = arith.constant 0 : index
    %77 = vector.load %arg3[%c0_84, %c8_85, %c0_86, %c0_87] : memref<1x12x8x128xf32, #tpu.memory_space<vmem>>, vector<1x1x8x128xf32>
    %78 = vector.shape_cast %77 : vector<1x1x8x128xf32> to vector<8x128xf32>
    %79 = arith.mulf %3, %78 : vector<8x128xf32>
    %80 = arith.maximumf %28, %31 : vector<8x128xf32>
    %81 = arith.maximumf %80, %34 : vector<8x128xf32>
    %82 = arith.maximumf %81, %37 : vector<8x128xf32>
    %83 = arith.maximumf %82, %40 : vector<8x128xf32>
    %84 = arith.maximumf %83, %43 : vector<8x128xf32>
    %85 = arith.maximumf %84, %46 : vector<8x128xf32>
    %86 = arith.maximumf %85, %49 : vector<8x128xf32>
    %87 = arith.maximumf %86, %52 : vector<8x128xf32>
    %88 = arith.subf %28, %87 : vector<8x128xf32>
    %89 = math.exp %88 : vector<8x128xf32>
    %90 = arith.subf %31, %87 : vector<8x128xf32>
    %91 = math.exp %90 : vector<8x128xf32>
    %92 = arith.addf %89, %91 : vector<8x128xf32>
    %93 = arith.subf %34, %87 : vector<8x128xf32>
    %94 = math.exp %93 : vector<8x128xf32>
    %95 = arith.addf %92, %94 : vector<8x128xf32>
    %96 = arith.subf %37, %87 : vector<8x128xf32>
    %97 = math.exp %96 : vector<8x128xf32>
    %98 = arith.addf %95, %97 : vector<8x128xf32>
    %99 = arith.subf %40, %87 : vector<8x128xf32>
    %100 = math.exp %99 : vector<8x128xf32>
    %101 = arith.addf %98, %100 : vector<8x128xf32>
    %102 = arith.subf %43, %87 : vector<8x128xf32>
    %103 = math.exp %102 : vector<8x128xf32>
    %104 = arith.addf %101, %103 : vector<8x128xf32>
    %105 = arith.subf %46, %87 : vector<8x128xf32>
    %106 = math.exp %105 : vector<8x128xf32>
    %107 = arith.addf %104, %106 : vector<8x128xf32>
    %108 = arith.subf %49, %87 : vector<8x128xf32>
    %109 = math.exp %108 : vector<8x128xf32>
    %110 = arith.addf %107, %109 : vector<8x128xf32>
    %111 = arith.subf %52, %87 : vector<8x128xf32>
    %112 = math.exp %111 : vector<8x128xf32>
    %113 = arith.addf %110, %112 : vector<8x128xf32>
    %114 = math.log %113 : vector<8x128xf32>
    %115 = arith.mulf %55, %28 : vector<8x128xf32>
    %116 = arith.addf %55, %58 : vector<8x128xf32>
    %117 = arith.mulf %58, %31 : vector<8x128xf32>
    %118 = arith.addf %115, %117 : vector<8x128xf32>
    %119 = arith.addf %116, %61 : vector<8x128xf32>
    %120 = arith.mulf %61, %34 : vector<8x128xf32>
    %121 = arith.addf %118, %120 : vector<8x128xf32>
    %122 = arith.addf %119, %64 : vector<8x128xf32>
    %123 = arith.mulf %64, %37 : vector<8x128xf32>
    %124 = arith.addf %121, %123 : vector<8x128xf32>
    %125 = arith.addf %122, %67 : vector<8x128xf32>
    %126 = arith.mulf %67, %40 : vector<8x128xf32>
    %127 = arith.addf %124, %126 : vector<8x128xf32>
    %128 = arith.addf %125, %70 : vector<8x128xf32>
    %129 = arith.mulf %70, %43 : vector<8x128xf32>
    %130 = arith.addf %127, %129 : vector<8x128xf32>
    %131 = arith.addf %128, %73 : vector<8x128xf32>
    %132 = arith.mulf %73, %46 : vector<8x128xf32>
    %133 = arith.addf %130, %132 : vector<8x128xf32>
    %134 = arith.addf %131, %76 : vector<8x128xf32>
    %135 = arith.mulf %76, %49 : vector<8x128xf32>
    %136 = arith.addf %133, %135 : vector<8x128xf32>
    %137 = arith.addf %134, %79 : vector<8x128xf32>
    %138 = arith.mulf %79, %52 : vector<8x128xf32>
    %139 = arith.addf %136, %138 : vector<8x128xf32>
    %140 = arith.addf %87, %114 : vector<8x128xf32>
    %141 = arith.mulf %140, %137 : vector<8x128xf32>
    %142 = arith.subf %141, %139 : vector<8x128xf32>
    %143 = arith.maximumf %28, %31 : vector<8x128xf32>
    %144 = arith.maximumf %143, %34 : vector<8x128xf32>
    %145 = arith.maximumf %144, %37 : vector<8x128xf32>
    %146 = arith.maximumf %145, %40 : vector<8x128xf32>
    %147 = arith.maximumf %146, %43 : vector<8x128xf32>
    %148 = arith.maximumf %147, %46 : vector<8x128xf32>
    %149 = arith.maximumf %148, %49 : vector<8x128xf32>
    %cst_88 = arith.constant 0.000000e+00 : f32
    %150 = vector.broadcast %cst_88 : f32 to vector<8x128xf32>
    %151 = arith.cmpf oeq, %79, %150 : vector<8x128xf32>
    %152 = arith.cmpf ogt, %52, %149 : vector<8x128xf32>
    %153 = arith.andi %151, %152 : vector<8x128xi1>
    %cst_89 = arith.constant 1.000000e-01 : f32
    %cst_90 = arith.constant 1.000000e+00 : f32
    %154 = vector.broadcast %cst_89 : f32 to vector<8x128xf32>
    %155 = vector.broadcast %cst_90 : f32 to vector<8x128xf32>
    %156 = arith.select %153, %154, %155 : vector<8x128xi1>, vector<8x128xf32>
    %cst_91 = arith.constant 0.00146484375 : f32
    %157 = vector.broadcast %cst_91 : f32 to vector<8x128xf32>
    %158 = arith.mulf %157, %18 : vector<8x128xf32>
    %cst_92 = arith.constant 0.001953125 : f32
    %159 = vector.broadcast %cst_92 : f32 to vector<8x128xf32>
    %160 = arith.mulf %159, %25 : vector<8x128xf32>
    %161 = arith.addf %158, %160 : vector<8x128xf32>
    %162 = arith.mulf %142, %156 : vector<8x128xf32>
    %cst_93 = arith.constant 0.001953125 : f32
    %163 = vector.broadcast %cst_93 : f32 to vector<8x128xf32>
    %164 = arith.mulf %163, %162 : vector<8x128xf32>
    %165 = arith.addf %161, %164 : vector<8x128xf32>
    %c0_94 = arith.constant 0 : index
    %c0_95 = arith.constant 0 : index
    %c0_96 = arith.constant 0 : index
    %c0_97 = arith.constant 0 : index
    %166 = vector.load %arg4[%c0_94, %c0_95, %c0_96, %c0_97] : memref<1x1x8x128xf32, #tpu.memory_space<vmem>>, vector<1x1x8x128xf32>
    %167 = vector.shape_cast %166 : vector<1x1x8x128xf32> to vector<8x128xf32>
    %168 = vector.shape_cast %165 : vector<8x128xf32> to vector<1x1x8x128xf32>
    tpu.vector_store %arg4[%c0_94, %c0_95, %c0_96, %c0_97], %168 {strides = array<i32>} : memref<1x1x8x128xf32, #tpu.memory_space<vmem>>, vector<1x1x8x128xf32>,
    return
  }
  func.func @transform_0(%arg0: i32, %arg1: i32) -> (i32, i32, i32, i32) {
    %c0_i32 = arith.constant 0 : i32
    %c0_i32_0 = arith.constant 0 : i32
    %c0_i32_1 = arith.constant 0 : i32
    return %arg0, %c0_i32, %arg1, %c0_i32_0 : i32, i32, i32, i32
  }
  func.func @transform_1(%arg0: i32, %arg1: i32) -> (i32, i32, i32, i32) {
    %c0_i32 = arith.constant 0 : i32
    %c0_i32_0 = arith.constant 0 : i32
    %c0_i32_1 = arith.constant 0 : i32
    return %arg0, %c0_i32, %arg1, %c0_i32_0 : i32, i32, i32, i32
  }
  func.func @transform_2(%arg0: i32, %arg1: i32) -> (i32, i32, i32, i32) {
    %c0_i32 = arith.constant 0 : i32
    %c0_i32_0 = arith.constant 0 : i32
    %c0_i32_1 = arith.constant 0 : i32
    return %arg0, %arg1, %c0_i32, %c0_i32_0 : i32, i32, i32, i32
  }
}

</mosaic_0001>

<llo_original>
// kernel: _lambda_.1
$region0: #{_lambda_.1}
  #allocation0 [shape = 'u32[]', space=smem, size = 0x4, offset = 0x4, fixed_abs, tag = 'smem constant byte address 0x4 - core index']
  #allocation1 [shape = 'u32[72,128]{1,0:T(1,128)}', space=vmem, size = 0x9000, scoped, tag = 'internal scratch']
  %s0 = inlined_call_operand.vmem [shape: f32[2,12,8,128], index: 0, kind: input, shape index: {}]
  %s1 = inlined_call_operand.vmem [shape: f32[2,12,8,128], index: 1, kind: input, shape index: {}]
  %s2 = inlined_call_operand.vmem [shape: f32[2,1,8,128], index: 2, kind: output, shape index: {}]
  %s3 = sld [smem:[#allocation0]]
  $region41: #{_lambda_.1} parent=0
    _
  %s5 = ssub.s32 1, %s3
  %s6 = scalar_select 0, %s5, %s3
  loop: start=0, step=1, limit=4
  $region2: #{_lambda_.1} parent=0 // loop_pre_header
    _
  $region3: #{_lambda_.1} parent=0 // loop_header
    %s8 = sphi 0, %s12
    %p9 = scmp.ge.s32.totalorder %s8, 4
    %s15 = sphi 0, %s27
    %s16 = sphi 0, %s23
    %s17 = sphi 0, %s15
    %s18 = sphi 0, %s16
    %s19 = sphi 0, %s17
    %s20 = sphi 0, %s18
    %s32 = sphi 0, %s34
    %s35 = sphi 0, %s32
    %s36 = sphi 0, %s35
    %s52 = sphi 0, %s36
    %s60 = sphi 0, %s62
    %s63 = sphi 0, %s60
    %s64 = sphi 0, %s63
    %s80 = sphi 0, %s64
    %s88 = sphi 0, %s90
    %s91 = sphi 0, %s88
    %s92 = sphi 0, %s91
    %s108 = sphi 0, %s92
  $region4: #{_lambda_.1} parent=0 // loop_header_branch
    %11 = sbr.rel (%p9) target = $region8
  $region5: #{_lambda_.1} parent=0 // loop_body
    %s13 = ssub.s32 %s8, 1
    %s14 = ssub.s32 %s8, 2
    %s21 = sadd.s32 1, %s16
    %p22 = scmp.ge.s32.totalorder %s21, 1
    %s23 = scalar_select %p22, 0, %s21
    %s24 = sadd.s32 1, %s15
    %s25 = scalar_select %p22, %s24, %s15
    %p26 = scmp.ge.s32.totalorder %s25, 2
    %s27 = scalar_select %p26, 0, %s25
    %s28 = ssub.s32 %s15, %s27
    %s29 = ssub.s32 %s16, %s23
    %s30 = sor.u32 %s28, %s29
    %p31 = scmp.eq.s32.totalorder %s30, 0
    %s33 = sadd.s32 %s32, 1
    %s34 = scalar_select %p31, %s32, %s33
    %p37 = pneg %p31
    %p38 = scmp.eq.s32.totalorder %s8, 1
    %p39 = por %p37, %p38
    %p40 = scmp.ne.s32.totalorder %s32, %s35
    %p41 = scmp.eq.s32.totalorder %s8, 0
    %p42 = por %p40, %p41
    %p43 = scmp.ne.s32.totalorder %s32, %s35
    %p44 = scmp.eq.s32.totalorder %s13, 1
    %p45 = por %p43, %p44
    %p46 = scmp.ne.s32.totalorder %s35, %s36
    %p47 = scmp.eq.s32.totalorder %s13, 0
    %p48 = por %p46, %p47
    %p49 = scmp.ne.s32.totalorder %s35, %s36
    %p50 = scmp.eq.s32.totalorder %s14, 1
    %p51 = por %p49, %p50
    %p53 = scmp.ne.s32.totalorder %s36, %s52
    %p54 = scmp.eq.s32.totalorder %s14, 0
    %p55 = por %p53, %p54
    %s56 = ssub.s32 %s15, %s27
    %s57 = ssub.s32 %s16, %s23
    %s58 = sor.u32 %s56, %s57
    %p59 = scmp.eq.s32.totalorder %s58, 0
    %s61 = sadd.s32 %s60, 1
    %s62 = scalar_select %p59, %s60, %s61
    %p65 = pneg %p59
    %p66 = scmp.eq.s32.totalorder %s8, 1
    %p67 = por %p65, %p66
    %p68 = scmp.ne.s32.totalorder %s60, %s63
    %p69 = scmp.eq.s32.totalorder %s8, 0
    %p70 = por %p68, %p69
    %p71 = scmp.ne.s32.totalorder %s60, %s63
    %p72 = scmp.eq.s32.totalorder %s13, 1
    %p73 = por %p71, %p72
    %p74 = scmp.ne.s32.totalorder %s63, %s64
    %p75 = scmp.eq.s32.totalorder %s13, 0
    %p76 = por %p74, %p75
    %p77 = scmp.ne.s32.totalorder %s63, %s64
    %p78 = scmp.eq.s32.totalorder %s14, 1
    %p79 = por %p77, %p78
    %p81 = scmp.ne.s32.totalorder %s64, %s80
    %p82 = scmp.eq.s32.totalorder %s14, 0
    %p83 = por %p81, %p82
    %s84 = ssub.s32 %s15, %s27
    %s85 = ssub.s32 %s16, %s23
    %s86 = sor.u32 %s84, %s85
    %p87 = scmp.eq.s32.totalorder %s86, 0
    %s89 = sadd.s32 %s88, 1
    %s90 = scalar_select %p87, %s88, %s89
    %p93 = pneg %p87
    %p94 = scmp.eq.s32.totalorder %s8, 1
    %p95 = por %p93, %p94
    %p96 = scmp.ne.s32.totalorder %s88, %s91
    %p97 = scmp.eq.s32.totalorder %s8, 0
    %p98 = por %p96, %p97
    %p99 = scmp.ne.s32.totalorder %s88, %s91
    %p100 = scmp.eq.s32.totalorder %s13, 1
    %p101 = por %p99, %p100
    %p102 = scmp.ne.s32.totalorder %s91, %s92
    %p103 = scmp.eq.s32.totalorder %s13, 0
    %p104 = por %p102, %p103
    %p105 = scmp.ne.s32.totalorder %s91, %s92
    %p106 = scmp.eq.s32.totalorder %s14, 1
    %p107 = por %p105, %p106
    %p109 = scmp.ne.s32.totalorder %s92, %s108
    %p110 = scmp.eq.s32.totalorder %s14, 0
    %p111 = por %p109, %p110
    %p112 = scmp.le.s32.totalorder 1, %s8
    %p113 = scmp.lt.s32.totalorder %s8, 3
    %p114 = pnand %p112, %p113
    %p115 = pneg %p114
    // Predicated region
    $region9: #{_lambda_.1} parent=5 // pred_check
      _
    $region10: #{_lambda_.1} parent=5 // pred_check_branch
      %117 = sbr.rel (%p114) target = $region12
    $region11: #{_lambda_.1} parent=5 // pred_region
      %s118 = ssub.s32 %s8, 1
    $region12: #{_lambda_.1} parent=5 // pred_fallthru
      _
    %p119 = scmp.lt.s32.totalorder %s8, 2
    // Predicated region
    $region13: #{_lambda_.1} parent=5 // pred_check
      %p120 = pneg %p119
    $region14: #{_lambda_.1} parent=5 // pred_check_branch
      %122 = sbr.rel (%p120) target = $region16
    $region15: #{_lambda_.1} parent=5 // pred_region
      // Predicated region
      $region17: #{_lambda_.1} parent=15 // pred_check
        %p123 = pneg %p42
      $region18: #{_lambda_.1} parent=15 // pred_check_branch
        %125 = sbr.rel (%p123) target = $region20
      $region19: #{_lambda_.1} parent=15 // pred_region
        %p126 = scmp.lt.s32.totalorder %s15, 1
        %s127 = scalar_select %p126, %s15, 1
        %p128 = scmp.lt.s32.totalorder %s16, 0
        %s129 = scalar_select %p128, %s16, 0
        %s130 = smul.addr %s127, 12
        %s131 = sadd.s32 %s129, %s130
        %s132 = smul.addr %s131, 8
        %s133 = scalar_lea.vmem %s0, %s132
      $region20: #{_lambda_.1} parent=15 // pred_fallthru
        _
      // Predicated region
      $region21: #{_lambda_.1} parent=15 // pred_check
        %p134 = pneg %p70
      $region22: #{_lambda_.1} parent=15 // pred_check_branch
        %136 = sbr.rel (%p134) target = $region24
      $region23: #{_lambda_.1} parent=15 // pred_region
        %p137 = scmp.lt.s32.totalorder %s15, 1
        %s138 = scalar_select %p137, %s15, 1
        %p139 = scmp.lt.s32.totalorder %s16, 0
        %s140 = scalar_select %p139, %s16, 0
        %s141 = smul.addr %s138, 12
        %s142 = sadd.s32 %s140, %s141
        %s143 = smul.addr %s142, 8
        %s144 = scalar_lea.vmem %s1, %s143
      $region24: #{_lambda_.1} parent=15 // pred_fallthru
        _
    $region16: #{_lambda_.1} parent=5 // pred_fallthru
      _
    %p145 = scmp.le.s32.totalorder 1, %s8
    %p146 = scmp.lt.s32.totalorder %s8, 3
    %p147 = pnand %p145, %p146
    %p148 = pneg %p147
    // Predicated region
    $region25: #{_lambda_.1} parent=5 // pred_check
      _
    $region26: #{_lambda_.1} parent=5 // pred_check_branch
      %150 = sbr.rel (%p147) target = $region28
    $region27: #{_lambda_.1} parent=5 // pred_region
      %s151 = ssub.s32 %s8, 1
      %p152 = scmp.lt.s32.totalorder %s17, 1
      %s153 = scalar_select %p152, %s17, 1
      %p154 = scmp.lt.s32.totalorder %s18, 0
      %s155 = scalar_select %p154, %s18, 0
      %s156 = smul.addr %s153, 12
      %s157 = sadd.s32 %s155, %s156
      %s158 = smul.addr %s157, 8
      %s159 = scalar_lea.vmem %s0, %s158
      %p160 = pneg %p48
      %p161 = pneg %p45
      %p162 = scmp.lt.s32.totalorder %s17, 1
      %s163 = scalar_select %p162, %s17, 1
      %p164 = scmp.lt.s32.totalorder %s18, 0
      %s165 = scalar_select %p164, %s18, 0
      %s166 = smul.addr %s163, 12
      %s167 = sadd.s32 %s165, %s166
      %s168 = smul.addr %s167, 8
      %s169 = scalar_lea.vmem %s1, %s168
      %p170 = pneg %p76
      %p171 = pneg %p73
      %p172 = pneg %p104
      %p173 = pneg %p101
      %p174 = scmp.lt.s32.totalorder %s17, 1
      %s175 = scalar_select %p174, %s17, 1
      %p176 = scmp.lt.s32.totalorder %s18, 0
      %s177 = scalar_select %p176, %s18, 0
      %s178 = sadd.s32 %s177, %s175
      %s179 = smul.addr %s178, 8
      %s180 = scalar_lea.vmem %s2, %s179
      %p181 = scmp.lt.s32.totalorder %s17, 1
      %s182 = scalar_select %p181, %s17, 1
      %p183 = scmp.lt.s32.totalorder %s18, 0
      %s184 = scalar_select %p183, %s18, 0
      %s185 = smul.addr %s182, 12
      %s186 = sadd.s32 %s184, %s185
      %s187 = smul.addr %s186, 8
      %s188 = scalar_lea.vmem %s0, %s187
      %p189 = scmp.lt.s32.totalorder %s17, 1
      %s190 = scalar_select %p189, %s17, 1
      %p191 = scmp.lt.s32.totalorder %s18, 0
      %s192 = scalar_select %p191, %s18, 0
      %s193 = smul.addr %s190, 12
      %s194 = sadd.s32 %s192, %s193
      %s195 = smul.addr %s194, 8
      %s196 = scalar_lea.vmem %s1, %s195
      %p197 = scmp.lt.s32.totalorder %s17, 1
      %s198 = scalar_select %p197, %s17, 1
      %p199 = scmp.lt.s32.totalorder %s18, 0
      %s200 = scalar_select %p199, %s18, 0
      %s201 = sadd.s32 %s200, %s198
      %s202 = smul.addr %s201, 8
      %s203 = scalar_lea.vmem %s2, %s202
      %s204 = scalar_lea.vmem %s196, 64
      %v205 = vld [vmem:[%s204] sm:$0xff]
      %v206 = vsub.f32 1.0, %v205
      %s207 = scalar_lea.vmem %s188, 72
      %v208 = vld [vmem:[%s207] sm:$0xff]
      %s209 = scalar_lea.vmem %s196, 72
      %v210 = vld [vmem:[%s209] sm:$0xff]
      %v211 = vsub.f32 %v208, %v210
      %v212 = vmul.f32 %v206, %v211
      %v213 = vand.u32 2147483647, %v212
      %s214 = scalar_lea.vmem %s188, 80
      %v215 = vld [vmem:[%s214] sm:$0xff]
      %s216 = scalar_lea.vmem %s196, 80
      %v217 = vld [vmem:[%s216] sm:$0xff]
      %v218 = vsub.f32 %v215, %v217
      %v219 = vmul.f32 %v206, %v218
      %v220 = vand.u32 2147483647, %v219
      %v221 = vadd.f32 %v213, %v220
      %s222 = scalar_lea.vmem %s188, 88
      %v223 = vld [vmem:[%s222] sm:$0xff]
      %s224 = scalar_lea.vmem %s196, 88
      %v225 = vld [vmem:[%s224] sm:$0xff]
      %v226 = vsub.f32 %v223, %v225
      %v227 = vmul.f32 %v206, %v226
      %v228 = vand.u32 2147483647, %v227
      %v229 = vld [vmem:[%s188] sm:$0xff]
      %v230 = vmul.f32 %v206, %v229
      %s231 = scalar_lea.vmem %s188, 8
      %v232 = vld [vmem:[%s231] sm:$0xff]
      %v233 = vmul.f32 %v206, %v232
      %s234 = scalar_lea.vmem %s188, 16
      %v235 = vld [vmem:[%s234] sm:$0xff]
      %v236 = vmul.f32 %v206, %v235
      %s237 = scalar_lea.vmem %s188, 24
      %v238 = vld [vmem:[%s237] sm:$0xff]
      %v239 = vmul.f32 %v206, %v238
      %s240 = scalar_lea.vmem %s188, 32
      %v241 = vld [vmem:[%s240] sm:$0xff]
      %v242 = vmul.f32 %v206, %v241
      %s243 = scalar_lea.vmem %s188, 40
      %v244 = vld [vmem:[%s243] sm:$0xff]
      %v245 = vmul.f32 %v206, %v244
      %s246 = scalar_lea.vmem %s188, 48
      %v247 = vld [vmem:[%s246] sm:$0xff]
      %v248 = vmul.f32 %v206, %v247
      %s249 = scalar_lea.vmem %s188, 56
      %v250 = vld [vmem:[%s249] sm:$0xff]
      %v251 = vmul.f32 %v206, %v250
      %s252 = scalar_lea.vmem %s188, 64
      %v253 = vld [vmem:[%s252] sm:$0xff]
      %v254 = vmul.f32 %v206, %v253
      %v255 = vld [vmem:[%s196] sm:$0xff]
      %v256 = vmul.f32 %v206, %v255
      %s257 = scalar_lea.vmem %s196, 8
      %v258 = vld [vmem:[%s257] sm:$0xff]
      %v259 = vmul.f32 %v206, %v258
      %s260 = scalar_lea.vmem %s196, 16
      %v261 = vld [vmem:[%s260] sm:$0xff]
      %v262 = vmul.f32 %v206, %v261
      %s263 = scalar_lea.vmem %s196, 24
      %v264 = vld [vmem:[%s263] sm:$0xff]
      %v265 = vmul.f32 %v206, %v264
      %s266 = scalar_lea.vmem %s196, 32
      %v267 = vld [vmem:[%s266] sm:$0xff]
      %v268 = vmul.f32 %v206, %v267
      %s269 = scalar_lea.vmem %s196, 40
      %v270 = vld [vmem:[%s269] sm:$0xff]
      %v271 = vmul.f32 %v206, %v270
      %s272 = scalar_lea.vmem %s196, 48
      %v273 = vld [vmem:[%s272] sm:$0xff]
      %v274 = vmul.f32 %v206, %v273
      %s275 = scalar_lea.vmem %s196, 56
      %v276 = vld [vmem:[%s275] sm:$0xff]
      %v277 = vmul.f32 %v206, %v276
      %v278 = vmul.f32 %v206, %v205
      %v279 = vmax.f32 %v230, %v233
      %v280 = vmax.f32 %v279, %v236
      %v281 = vmax.f32 %v280, %v239
      %v282 = vmax.f32 %v281, %v242
      %v283 = vmax.f32 %v282, %v245
      %v284 = vmax.f32 %v283, %v248
      %v285 = vmax.f32 %v284, %v251
      %v286 = vmax.f32 %v285, %v254
      %v287 = vsub.f32 %v230, %v286
      %v288 = vmul.f32 %v287, 1.442695
      %v289 = vpow.pop %v288
      %v290 = vsub.f32 %v233, %v286
      %v291 = vmul.f32 %v290, 1.442695
      %v292 = vpow.pop %v291
      %v293 = vadd.f32 %v289, %v292
      %v294 = vsub.f32 %v236, %v286
      %v295 = vmul.f32 %v294, 1.442695
      %v296 = vpow.pop %v295
      %v297 = vadd.f32 %v293, %v296
      %v298 = vsub.f32 %v239, %v286
      %v299 = vmul.f32 %v298, 1.442695
      %v300 = vpow.pop %v299
      %v301 = vadd.f32 %v297, %v300
      %v302 = vsub.f32 %v242, %v286
      %v303 = vmul.f32 %v302, 1.442695
      %v304 = vpow.pop %v303
      %v305 = vadd.f32 %v301, %v304
      %v306 = vsub.f32 %v245, %v286
      %v307 = vmul.f32 %v306, 1.442695
      %v308 = vpow.pop %v307
      %v309 = vadd.f32 %v305, %v308
      %v310 = vsub.f32 %v248, %v286
      %v311 = vmul.f32 %v310, 1.442695
      %v312 = vpow.pop %v311
      %v313 = vadd.f32 %v309, %v312
      %v314 = vsub.f32 %v251, %v286
      %v315 = vmul.f32 %v314, 1.442695
      %v316 = vpow.pop %v315
      %v317 = vadd.f32 %v313, %v316
      %v318 = vsub.f32 %v254, %v286
      %v319 = vmul.f32 %v318, 1.442695
      %v320 = vpow.pop %v319
      %v321 = vadd.f32 %v317, %v320
      %v322 = vlog2.pop %v321
      %v323 = vmul.f32 %v322, 0.6931472
      %v324 = vmul.f32 %v256, %v230
      %v325 = vadd.f32 %v256, %v259
      %v326 = vmul.f32 %v259, %v233
      %v327 = vadd.f32 %v324, %v326
      %v328 = vadd.f32 %v325, %v262
      %v329 = vmul.f32 %v262, %v236
      %v330 = vadd.f32 %v327, %v329
      %v331 = vadd.f32 %v328, %v265
      %v332 = vmul.f32 %v265, %v239
      %v333 = vadd.f32 %v330, %v332
      %v334 = vadd.f32 %v331, %v268
      %v335 = vmul.f32 %v268, %v242
      %v336 = vadd.f32 %v333, %v335
      %v337 = vadd.f32 %v334, %v271
      %v338 = vmul.f32 %v271, %v245
      %v339 = vadd.f32 %v336, %v338
      %v340 = vadd.f32 %v337, %v274
      %v341 = vmul.f32 %v274, %v248
      %v342 = vadd.f32 %v339, %v341
      %v343 = vadd.f32 %v340, %v277
      %v344 = vmul.f32 %v277, %v251
      %v345 = vadd.f32 %v342, %v344
      %v346 = vadd.f32 %v343, %v278
      %v347 = vmul.f32 %v278, %v254
      %v348 = vadd.f32 %v345, %v347
      %v349 = vadd.f32 %v286, %v323
      %v350 = vmul.f32 %v349, %v346
      %v351 = vsub.f32 %v350, %v348
      %vm352 = vcmp.eq.f32.partialorder %v278, 0.0
      %vm353 = vcmp.gt.f32.partialorder %v254, %v285
      %vm354 = vmand %vm352, %vm353
      %v355 = vsel %vm354, 0.1, 1.0
      %v356 = vmul.f32 %v221, 0.0014648438
      %v357 = vmul.f32 %v228, 0.001953125
      %v358 = vadd.f32 %v356, %v357
      %v359 = vmul.f32 %v351, %v355
      %v360 = vmul.f32 %v359, 0.001953125
      %v361 = vadd.f32 %v358, %v360
      %362 = vst [vmem:[%s203] sm:$0xff] %v361
      %p363 = scmp.lt.s32.totalorder %s17, 1
      %s364 = scalar_select %p363, %s17, 1
      %p365 = scmp.lt.s32.totalorder %s18, 0
      %s366 = scalar_select %p365, %s18, 0
      %s367 = sadd.s32 %s366, %s364
      %s368 = smul.addr %s367, 8
      %s369 = scalar_lea.vmem %s2, %s368
      // Predicated region
      $region29: #{_lambda_.1} parent=27 // pred_check
        %p370 = pneg %p101
      $region30: #{_lambda_.1} parent=27 // pred_check_branch
        %372 = sbr.rel (%p370) target = $region32
      $region31: #{_lambda_.1} parent=27 // pred_region
        _
      $region32: #{_lambda_.1} parent=27 // pred_fallthru
        _
    $region28: #{_lambda_.1} parent=5 // pred_fallthru
      _
    %p373 = scmp.le.s32.totalorder 2, %s8
    // Predicated region
    $region33: #{_lambda_.1} parent=5 // pred_check
      %p374 = pneg %p373
    $region34: #{_lambda_.1} parent=5 // pred_check_branch
      %376 = sbr.rel (%p374) target = $region36
    $region35: #{_lambda_.1} parent=5 // pred_region
      %s377 = ssub.s32 %s8, 2
      // Predicated region
      $region37: #{_lambda_.1} parent=35 // pred_check
        %p378 = pneg %p107
      $region38: #{_lambda_.1} parent=35 // pred_check_branch
        %380 = sbr.rel (%p378) target = $region40
      $region39: #{_lambda_.1} parent=35 // pred_region
        %p381 = scmp.lt.s32.totalorder %s19, 1
        %s382 = scalar_select %p381, %s19, 1
        %p383 = scmp.lt.s32.totalorder %s20, 0
        %s384 = scalar_select %p383, %s20, 0
        %s385 = sadd.s32 %s384, %s382
        %s386 = smul.addr %s385, 8
        %s387 = scalar_lea.vmem %s2, %s386
      $region40: #{_lambda_.1} parent=35 // pred_fallthru
        _
    $region36: #{_lambda_.1} parent=5 // pred_fallthru
      _
  $region6: #{_lambda_.1} parent=0 // loop_footer
    %s12 = sadd.s32 1, %s8
  $region7: #{_lambda_.1} parent=0 // loop_footer_branch
    %7 = sbr.rel target = $region3
  $region8: #{_lambda_.1} parent=0 // loop_exit
    _

</llo_original>
